<compile_context>
chip_gen: v6e
topology: v6e:2x2x1
jax: 0.10.0
libtpu: 0.0.40
codegen_flags: <defaults>
</compile_context>

<pallas_src>
import functools

import jax
import jax.numpy as jnp
from jax.experimental import pallas as pl
from jax.experimental.pallas import tpu as pltpu


def _round_up(x, m):
    return ((x + m - 1) // m) * m


def _mlp_kernel(xt_ref, w1_ref, b1_ref, w2_ref, b2_ref, w3_ref, b3_ref, o_ref):
    # xt_ref: (D, T)  bf16     w1_ref: (H1, D)  bf16   b1_ref: (H1, 1) f32
    # w2_ref: (H2,H1) bf16     b2_ref: (H2, 1)  f32
    # w3_ref: (1, H2) bf16     b3_ref: (1,)     f32 (SMEM scalar)
    # o_ref : (1, T)  f32
    #
    # Layer 1: (H1, D) @ (D, T) -> (H1, T); bf16 MXU feed, f32 accumulation.
    h1 = jnp.dot(w1_ref[...], xt_ref[...], preferred_element_type=jnp.float32)
    h1 = jnp.maximum(h1 + b1_ref[...], 0.0)          # f32 bias + ReLU (VPU)

    # Layer 2: (H2, H1) @ (H1, T) -> (H2, T)
    h2 = jnp.dot(w2_ref[...], h1.astype(w2_ref.dtype),
                 preferred_element_type=jnp.float32)
    h2 = jnp.maximum(h2 + b2_ref[...], 0.0)

    # Head: (1, H2) @ (H2, T) -> (1, T)  — lane-dense result, no relayout.
    out = jnp.dot(w3_ref[...], h2.astype(w3_ref.dtype),
                  preferred_element_type=jnp.float32)
    o_ref[...] = (out + b3_ref[0]).astype(o_ref.dtype)


@functools.partial(jax.jit, static_argnames=("batch_tile",))
def naive_neural_forward(x, w1, b1, w2, b2, w3, b3, *, batch_tile=None):
    """NaiveNeural forward.

    x : [B, D] float32
    w1: [H1, D], w2: [H2, H1], w3: [1, H2]   (torch nn.Linear weight layout)
    b1: [H1],    b2: [H2],     b3: [1]
    """
    orig_dtype = x.dtype
    B, D = x.shape
    H1 = w1.shape[0]
    H2 = w2.shape[0]
    assert w1.shape == (H1, D) and w2.shape == (H2, H1) and w3.shape == (1, H2)

    if batch_tile is None:
        # Largest tile up to 2048 rows (per-step overhead amortization) while
        # keeping >=2 grid steps when B allows it, so ("parallel",) can shard
        # the grid across both v7x TensorCores.  VMEM is not a constraint:
        # even a 2048-row tile is only a few MiB including intermediates.
        batch_tile = max(128, min(2048, _round_up(pl.cdiv(B, 2), 128)))
    assert batch_tile % 128 == 0, "keep the batch tile MXU/lane aligned"

    num_tiles = pl.cdiv(B, batch_tile)
    padded_b = num_tiles * batch_tile

    # One fused wrapper pass over x: feature-major transpose + bf16 cast +
    # ragged-tail zero pad.  Padded tail columns produce bias-only values that
    # are sliced off below (do NOT reduce over them).
    xt = jnp.pad(x.T.astype(jnp.bfloat16), ((0, 0), (0, padded_b - B)))

    w1_bf = w1.astype(jnp.bfloat16)
    w2_bf = w2.astype(jnp.bfloat16)
    w3_bf = w3.astype(jnp.bfloat16)
    b1_c = b1.reshape(H1, 1).astype(jnp.float32)
    b2_c = b2.reshape(H2, 1).astype(jnp.float32)
    b3_c = b3.reshape(1).astype(jnp.float32)            # SMEM scalar

    flops = 2 * padded_b * (D * H1 + H1 * H2 + H2 * 1)
    bytes_accessed = (
        padded_b * D * 2                                 # x^T (bf16)
        + (H1 * D + H2 * H1 + H2) * 2                    # weights (bf16)
        + (H1 + H2 + 1) * 4                              # biases (f32)
        + padded_b * 4                                   # output (f32)
    )

    out = pl.pallas_call(
        _mlp_kernel,
        out_shape=jax.ShapeDtypeStruct((1, padded_b), jnp.float32),
        grid_spec=pltpu.PrefetchScalarGridSpec(
            num_scalar_prefetch=0,
            grid=(num_tiles,),
            in_specs=[
                pl.BlockSpec((D, batch_tile), lambda i: (0, i)),    # x^T tile
                pl.BlockSpec((H1, D), lambda i: (0, 0)),            # W1 (resident)
                pl.BlockSpec((H1, 1), lambda i: (0, 0)),            # b1
                pl.BlockSpec((H2, H1), lambda i: (0, 0)),           # W2
                pl.BlockSpec((H2, 1), lambda i: (0, 0)),            # b2
                pl.BlockSpec((1, H2), lambda i: (0, 0)),            # W3
                pl.BlockSpec(memory_space=pltpu.MemorySpace.SMEM),  # b3 scalar
            ],
            out_specs=pl.BlockSpec((1, batch_tile), lambda i: (0, i)),
        ),
        compiler_params=pltpu.CompilerParams(
            dimension_semantics=("parallel",),   # shards grid across v7x's 2 TCs
        ),
        cost_estimate=pl.CostEstimate(
            flops=flops, transcendentals=0, bytes_accessed=bytes_accessed),
    )(xt, w1_bf, b1_c, w2_bf, b2_c, w3_bf, b3_c)

    # (1, padded_b) lane-dense row -> (B, 1) column; padding stripped here
    # (tail rows are bias-driven garbage by construction).
    return out.reshape(padded_b, 1)[:B].astype(orig_dtype)


def _torch_linear_init(key, fan_in, fan_out, use_bias=True, dtype=jnp.float32):
    """Deterministic init matching torch.nn.Linear defaults:
    W ~ U(-1/sqrt(fan_in), 1/sqrt(fan_in)), stored in torch layout [out, in]."""
    kw, kb = jax.random.split(key)
    bound = 1.0 / jnp.sqrt(jnp.float32(fan_in))
    w = jax.random.uniform(kw, (fan_out, fan_in), dtype, minval=-bound, maxval=bound)
    if use_bias:
        b = jax.random.uniform(kb, (fan_out,), dtype, minval=-bound, maxval=bound)
    else:
        b = jnp.zeros((fan_out,), dtype)
    return w, b


def reference_forward(x, w1, b1, w2, b2, w3, b3):
    """Pure-JAX reference mirroring the kernel's bf16-in / f32-accumulate casts."""
    bf = lambda v: v.astype(jnp.bfloat16).astype(jnp.float32)
    h1 = jnp.maximum(bf(x) @ bf(w1).T + b1[None, :], 0.0)
    h2 = jnp.maximum(bf(h1) @ bf(w2).T + b2[None, :], 0.0)
    return bf(h2) @ bf(w3).T + b3[None, :]


if __name__ == "__main__":
    # Module config (consistent with NaiveNeural.__init__):
    #   blocks = two modalities with 10 and 6 features -> input_size = 16
    #   fc_units = [128, 64, 1], fc_layers = 3, dropout p = 0.0 (identity)
    #   hazard_fc_last_layer_bias = True
    blocks = [list(range(10)), list(range(6))]
    input_size = sum(len(b) for b in blocks)        # 16
    H1, H2, H3 = 128, 64, 1
    last_layer_bias = True

    batch = 300   # not a tile multiple -> exercises ragged tail + 2-step grid
    key = jax.random.PRNGKey(0)
    kx, k1, k2, k3 = jax.random.split(key, 4)

    x = jax.random.normal(kx, (batch, input_size), jnp.float32)
    w1, b1 = _torch_linear_init(k1, input_size, H1)
    w2, b2 = _torch_linear_init(k2, H1, H2)
    w3, b3 = _torch_linear_init(k3, H2, H3, use_bias=last_layer_bias)

    out = naive_neural_forward(x, w1, b1, w2, b2, w3, b3)
    out = jax.block_until_ready(out)

    ref = reference_forward(x, w1, b1, w2, b2, w3, b3)
    assert out.shape == (batch, 1), out.shape
    # bf16 matmul inputs -> allow small deviations vs the (cast-mirrored) reference.
    assert jnp.allclose(out, ref, atol=1e-2, rtol=1e-2), (
        "mismatch vs reference, max abs err = "
        f"{float(jnp.max(jnp.abs(out - ref)))}")

    print("KERNEL_OK")
</pallas_src>

<mosaic_0001>
module attributes {stable_mosaic.version = 11 : i64} {
  func.func @_mlp_kernel(%arg0: i32, %arg1: memref<16x256xbf16, #tpu.memory_space<vmem>>, %arg2: memref<128x16xbf16, #tpu.memory_space<vmem>>, %arg3: memref<128x1xf32, #tpu.memory_space<vmem>>, %arg4: memref<64x128xbf16, #tpu.memory_space<vmem>>, %arg5: memref<64x1xf32, #tpu.memory_space<vmem>>, %arg6: memref<1x64xbf16, #tpu.memory_space<vmem>>, %arg7: memref<1xf32, #tpu.memory_space<smem>>, %arg8: memref<1x256xf32, #tpu.memory_space<vmem>>) attributes {dimension_semantics = [#tpu.dimension_semantics<parallel>], iteration_bounds = array<i64: 2>, scalar_prefetch = 0 : i64, scratch_operands = 0 : i64, tpu.core_type = #tpu.core_type<tc>, window_params = [{transform_indices = @transform_0, window_bounds = array<i64: 16, 256>}, {pipeline_mode = #tpu.pipeline_mode<synchronous>, transform_indices = @transform_1, window_bounds = array<i64: 128, 16>}, {pipeline_mode = #tpu.pipeline_mode<synchronous>, transform_indices = @transform_2, window_bounds = array<i64: 128, 1>}, {pipeline_mode = #tpu.pipeline_mode<synchronous>, transform_indices = @transform_3, window_bounds = array<i64: 64, 128>}, {pipeline_mode = #tpu.pipeline_mode<synchronous>, transform_indices = @transform_4, window_bounds = array<i64: 64, 1>}, {pipeline_mode = #tpu.pipeline_mode<synchronous>, transform_indices = @transform_5, window_bounds = array<i64: 1, 64>}, {transform_indices = @transform_6, window_bounds = array<i64: 1>}, {transform_indices = @transform_7, window_bounds = array<i64: 1, 256>}]} {
    %c0 = arith.constant 0 : index
    %c0_0 = arith.constant 0 : index
    %0 = vector.load %arg2[%c0, %c0_0] : memref<128x16xbf16, #tpu.memory_space<vmem>>, vector<128x16xbf16>
    %c0_1 = arith.constant 0 : index
    %c0_2 = arith.constant 0 : index
    %1 = vector.load %arg1[%c0_1, %c0_2] : memref<16x256xbf16, #tpu.memory_space<vmem>>, vector<16x256xbf16>
    %cst = arith.constant dense<0.000000e+00> : vector<128x256xf32>
    %2 = tpu.matmul %0, %1, %cst {dimension_numbers = #tpu.dot_dimension_numbers<[1], [0], [0], [1], [0, 0, 1, 1], [], []>} : vector<128x16xbf16>, vector<16x256xbf16>, vector<128x256xf32> -> vector<128x256xf32>
    %c0_3 = arith.constant 0 : index
    %c0_4 = arith.constant 0 : index
    %3 = vector.load %arg3[%c0_3, %c0_4] : memref<128x1xf32, #tpu.memory_space<vmem>>, vector<128x1xf32>
    %4 = vector.broadcast %3 : vector<128x1xf32> to vector<128x256xf32>
    %5 = arith.addf %2, %4 : vector<128x256xf32>
    %cst_5 = arith.constant 0.000000e+00 : f32
    %6 = vector.broadcast %cst_5 : f32 to vector<128x256xf32>
    %7 = arith.maximumf %5, %6 : vector<128x256xf32>
    %c0_6 = arith.constant 0 : index
    %c0_7 = arith.constant 0 : index
    %8 = vector.load %arg4[%c0_6, %c0_7] : memref<64x128xbf16, #tpu.memory_space<vmem>>, vector<64x128xbf16>
    %9 = arith.truncf %7 : vector<128x256xf32> to vector<128x256xbf16>
    %cst_8 = arith.constant dense<0.000000e+00> : vector<64x256xf32>
    %10 = tpu.matmul %8, %9, %cst_8 {dimension_numbers = #tpu.dot_dimension_numbers<[1], [0], [0], [1], [0, 0, 1, 1], [], []>} : vector<64x128xbf16>, vector<128x256xbf16>, vector<64x256xf32> -> vector<64x256xf32>
    %c0_9 = arith.constant 0 : index
    %c0_10 = arith.constant 0 : index
    %11 = vector.load %arg5[%c0_9, %c0_10] : memref<64x1xf32, #tpu.memory_space<vmem>>, vector<64x1xf32>
    %12 = vector.broadcast %11 : vector<64x1xf32> to vector<64x256xf32>
    %13 = arith.addf %10, %12 : vector<64x256xf32>
    %cst_11 = arith.constant 0.000000e+00 : f32
    %14 = vector.broadcast %cst_11 : f32 to vector<64x256xf32>
    %15 = arith.maximumf %13, %14 : vector<64x256xf32>
    %c0_12 = arith.constant 0 : index
    %c0_13 = arith.constant 0 : index
    %16 = vector.load %arg6[%c0_12, %c0_13] : memref<1x64xbf16, #tpu.memory_space<vmem>>, vector<1x64xbf16>
    %17 = arith.truncf %15 : vector<64x256xf32> to vector<64x256xbf16>
    %cst_14 = arith.constant dense<0.000000e+00> : vector<1x256xf32>
    %18 = tpu.matmul %16, %17, %cst_14 {dimension_numbers = #tpu.dot_dimension_numbers<[1], [0], [0], [1], [0, 0, 1, 1], [], []>} : vector<1x64xbf16>, vector<64x256xbf16>, vector<1x256xf32> -> vector<1x256xf32>
    %c0_15 = arith.constant 0 : index
    %19 = memref.load %arg7[%c0_15] : memref<1xf32, #tpu.memory_space<smem>>
    %20 = vector.broadcast %19 : f32 to vector<1x256xf32>
    %21 = arith.addf %18, %20 : vector<1x256xf32>
    %c0_16 = arith.constant 0 : index
    %c0_17 = arith.constant 0 : index
    %22 = vector.load %arg8[%c0_16, %c0_17] : memref<1x256xf32, #tpu.memory_space<vmem>>, vector<1x256xf32>
    tpu.vector_store %arg8[%c0_16, %c0_17], %21 {strides = array<i32>} : memref<1x256xf32, #tpu.memory_space<vmem>>, vector<1x256xf32>,
    return
  }
  func.func @transform_0(%arg0: i32) -> (i32, i32) {
    %c0_i32 = arith.constant 0 : i32
    %c0_i32_0 = arith.constant 0 : i32
    return %c0_i32, %arg0 : i32, i32
  }
  func.func @transform_1(%arg0: i32) -> (i32, i32) {
    %c0_i32 = arith.constant 0 : i32
    %c0_i32_0 = arith.constant 0 : i32
    %c0_i32_1 = arith.constant 0 : i32
    return %c0_i32, %c0_i32_0 : i32, i32
  }
  func.func @transform_2(%arg0: i32) -> (i32, i32) {
    %c0_i32 = arith.constant 0 : i32
    %c0_i32_0 = arith.constant 0 : i32
    %c0_i32_1 = arith.constant 0 : i32
    return %c0_i32, %c0_i32_0 : i32, i32
  }
  func.func @transform_3(%arg0: i32) -> (i32, i32) {
    %c0_i32 = arith.constant 0 : i32
    %c0_i32_0 = arith.constant 0 : i32
    %c0_i32_1 = arith.constant 0 : i32
    return %c0_i32, %c0_i32_0 : i32, i32
  }
  func.func @transform_4(%arg0: i32) -> (i32, i32) {
    %c0_i32 = arith.constant 0 : i32
    %c0_i32_0 = arith.constant 0 : i32
    %c0_i32_1 = arith.constant 0 : i32
    return %c0_i32, %c0_i32_0 : i32, i32
  }
  func.func @transform_5(%arg0: i32) -> (i32, i32) {
    %c0_i32 = arith.constant 0 : i32
    %c0_i32_0 = arith.constant 0 : i32
    %c0_i32_1 = arith.constant 0 : i32
    return %c0_i32, %c0_i32_0 : i32, i32
  }
  func.func @transform_6(%arg0: i32) -> i32 {
    %c0_i32 = arith.constant 0 : i32
    %c0_i32_0 = arith.constant 0 : i32
    return %c0_i32 : i32
  }
  func.func @transform_7(%arg0: i32) -> (i32, i32) {
    %c0_i32 = arith.constant 0 : i32
    %c0_i32_0 = arith.constant 0 : i32
    return %c0_i32, %arg0 : i32, i32
  }
}

</mosaic_0001>

<llo_original>
// kernel: naive_neural_forward.1
$region0: #{naive_neural_forward.1}
  #allocation0 [shape = 'u32[]', space=smem, size = 0x4, offset = 0x4, fixed_abs, tag = 'smem constant byte address 0x4 - core index']
  #allocation1 [shape = 'u32[144,128]{1,0:T(1,128)}', space=vmem, size = 0x12000, scoped, tag = 'internal scratch']
  #allocation2 [shape = 'f32[1]{0:T(128)S(6)}', space=smem, size = 0x200, scoped, tag = 'scoped memory for naive_neural_forward.1']
  %s0 = inlined_call_operand.vmem [shape: bf16[16,512], index: 0, kind: input, shape index: {}]
  %s1 = inlined_call_operand.vmem [shape: bf16[128,16], index: 1, kind: input, shape index: {}]
  %s2 = inlined_call_operand.vmem [shape: f32[128,1], index: 2, kind: input, shape index: {}]
  %s3 = inlined_call_operand.vmem [shape: bf16[64,128], index: 3, kind: input, shape index: {}]
  %s4 = inlined_call_operand.vmem [shape: f32[64,1], index: 4, kind: input, shape index: {}]
  %s5 = inlined_call_operand.vmem [shape: bf16[1,64], index: 5, kind: input, shape index: {}]
  %s6 = inlined_call_operand.<no memory space> [shape: f32[1], index: 6, kind: input, shape index: {}]
  %s7 = inlined_call_operand.vmem [shape: f32[1,512], index: 7, kind: output, shape index: {}]
  %s8 = sld [smem:[#allocation0]]
  $region99: #{naive_neural_forward.1} parent=0
    _
  %s10 = ssub.s32 1, %s8
  %s11 = scalar_select 0, %s10, %s8
  %12 = sst [smem:[#allocation2]] %s6
  $region1: #{naive_neural_forward.1} parent=0
    #allocation3 [shape = 'u8[16384]{0}', space=vmem, size = 0x4000, scoped, tag = 'input window, operand 0']
    loop: start=0, step=1, limit=4
    $region2: #{naive_neural_forward.1} parent=1 // loop_pre_header
      _
    $region3: #{naive_neural_forward.1} parent=1 // loop_header
      %s14 = sphi 0, %s18
      %p15 = scmp.ge.s32.totalorder %s14, 4
      %s24 = sphi 0, %s26
      %s27 = sphi 0, %s24
      %s28 = sphi 0, %s27
      %s44 = sphi 0, %s28
      %s48 = sphi 0, %s48
      %s50 = sphi 0, %s48
      %s51 = sphi 0, %s50
      %s65 = sphi 0, %s51
      %s69 = sphi 0, %s69
      %s71 = sphi 0, %s69
      %s72 = sphi 0, %s71
      %s86 = sphi 0, %s72
      %s90 = sphi 0, %s90
      %s92 = sphi 0, %s90
      %s93 = sphi 0, %s92
      %s107 = sphi 0, %s93
      %s111 = sphi 0, %s111
      %s113 = sphi 0, %s111
      %s114 = sphi 0, %s113
      %s128 = sphi 0, %s114
      %s132 = sphi 0, %s132
      %s134 = sphi 0, %s132
      %s135 = sphi 0, %s134
      %s149 = sphi 0, %s135
      %s153 = sphi 0, %s153
      %s155 = sphi 0, %s153
      %s156 = sphi 0, %s155
      %s170 = sphi 0, %s156
      %s176 = sphi 0, %s178
      %s179 = sphi 0, %s176
      %s180 = sphi 0, %s179
      %s196 = sphi 0, %s180
    $region4: #{naive_neural_forward.1} parent=1 // loop_header_branch
      %17 = sbr.rel (%p15) target = $region8
    $region5: #{naive_neural_forward.1} parent=1 // loop_body
      %s19 = ssub.s32 %s14, 1
      %s20 = ssub.s32 %s14, 2
      %s21 = sadd.s32 %s14, 1
      %s22 = ssub.s32 %s14, %s21
      %p23 = scmp.eq.s32.totalorder %s22, 0
      %s25 = sadd.s32 %s24, 1
      %s26 = scalar_select %p23, %s24, %s25
      %p29 = pneg %p23
      %p30 = scmp.eq.s32.totalorder %s14, 1
      %p31 = por %p29, %p30
      %p32 = scmp.ne.s32.totalorder %s24, %s27
      %p33 = scmp.eq.s32.totalorder %s14, 0
      %p34 = por %p32, %p33
      %p35 = scmp.ne.s32.totalorder %s24, %s27
      %p36 = scmp.eq.s32.totalorder %s19, 1
      %p37 = por %p35, %p36
      %p38 = scmp.ne.s32.totalorder %s27, %s28
      %p39 = scmp.eq.s32.totalorder %s19, 0
      %p40 = por %p38, %p39
      %p41 = scmp.ne.s32.totalorder %s27, %s28
      %p42 = scmp.eq.s32.totalorder %s20, 1
      %p43 = por %p41, %p42
      %p45 = scmp.ne.s32.totalorder %s28, %s44
      %p46 = scmp.eq.s32.totalorder %s20, 0
      %p47 = por %p45, %p46
      %s49 = sadd.s32 %s48, 1
      %p52 = scmp.eq.s32.totalorder %s14, 1
      %p53 = scmp.ne.s32.totalorder %s48, %s50
      %p54 = scmp.eq.s32.totalorder %s14, 0
      %p55 = por %p53, %p54
      %p56 = scmp.ne.s32.totalorder %s48, %s50
      %p57 = scmp.eq.s32.totalorder %s19, 1
      %p58 = por %p56, %p57
      %p59 = scmp.ne.s32.totalorder %s50, %s51
      %p60 = scmp.eq.s32.totalorder %s19, 0
      %p61 = por %p59, %p60
      %p62 = scmp.ne.s32.totalorder %s50, %s51
      %p63 = scmp.eq.s32.totalorder %s20, 1
      %p64 = por %p62, %p63
      %p66 = scmp.ne.s32.totalorder %s51, %s65
      %p67 = scmp.eq.s32.totalorder %s20, 0
      %p68 = por %p66, %p67
      %s70 = sadd.s32 %s69, 1
      %p73 = scmp.eq.s32.totalorder %s14, 1
      %p74 = scmp.ne.s32.totalorder %s69, %s71
      %p75 = scmp.eq.s32.totalorder %s14, 0
      %p76 = por %p74, %p75
      %p77 = scmp.ne.s32.totalorder %s69, %s71
      %p78 = scmp.eq.s32.totalorder %s19, 1
      %p79 = por %p77, %p78
      %p80 = scmp.ne.s32.totalorder %s71, %s72
      %p81 = scmp.eq.s32.totalorder %s19, 0
      %p82 = por %p80, %p81
      %p83 = scmp.ne.s32.totalorder %s71, %s72
      %p84 = scmp.eq.s32.totalorder %s20, 1
      %p85 = por %p83, %p84
      %p87 = scmp.ne.s32.totalorder %s72, %s86
      %p88 = scmp.eq.s32.totalorder %s20, 0
      %p89 = por %p87, %p88
      %s91 = sadd.s32 %s90, 1
      %p94 = scmp.eq.s32.totalorder %s14, 1
      %p95 = scmp.ne.s32.totalorder %s90, %s92
      %p96 = scmp.eq.s32.totalorder %s14, 0
      %p97 = por %p95, %p96
      %p98 = scmp.ne.s32.totalorder %s90, %s92
      %p99 = scmp.eq.s32.totalorder %s19, 1
      %p100 = por %p98, %p99
      %p101 = scmp.ne.s32.totalorder %s92, %s93
      %p102 = scmp.eq.s32.totalorder %s19, 0
      %p103 = por %p101, %p102
      %p104 = scmp.ne.s32.totalorder %s92, %s93
      %p105 = scmp.eq.s32.totalorder %s20, 1
      %p106 = por %p104, %p105
      %p108 = scmp.ne.s32.totalorder %s93, %s107
      %p109 = scmp.eq.s32.totalorder %s20, 0
      %p110 = por %p108, %p109
      %s112 = sadd.s32 %s111, 1
      %p115 = scmp.eq.s32.totalorder %s14, 1
      %p116 = scmp.ne.s32.totalorder %s111, %s113
      %p117 = scmp.eq.s32.totalorder %s14, 0
      %p118 = por %p116, %p117
      %p119 = scmp.ne.s32.totalorder %s111, %s113
      %p120 = scmp.eq.s32.totalorder %s19, 1
      %p121 = por %p119, %p120
      %p122 = scmp.ne.s32.totalorder %s113, %s114
      %p123 = scmp.eq.s32.totalorder %s19, 0
      %p124 = por %p122, %p123
      %p125 = scmp.ne.s32.totalorder %s113, %s114
      %p126 = scmp.eq.s32.totalorder %s20, 1
      %p127 = por %p125, %p126
      %p129 = scmp.ne.s32.totalorder %s114, %s128
      %p130 = scmp.eq.s32.totalorder %s20, 0
      %p131 = por %p129, %p130
      %s133 = sadd.s32 %s132, 1
      %p136 = scmp.eq.s32.totalorder %s14, 1
      %p137 = scmp.ne.s32.totalorder %s132, %s134
      %p138 = scmp.eq.s32.totalorder %s14, 0
      %p139 = por %p137, %p138
      %p140 = scmp.ne.s32.totalorder %s132, %s134
      %p141 = scmp.eq.s32.totalorder %s19, 1
      %p142 = por %p140, %p141
      %p143 = scmp.ne.s32.totalorder %s134, %s135
      %p144 = scmp.eq.s32.totalorder %s19, 0
      %p145 = por %p143, %p144
      %p146 = scmp.ne.s32.totalorder %s134, %s135
      %p147 = scmp.eq.s32.totalorder %s20, 1
      %p148 = por %p146, %p147
      %p150 = scmp.ne.s32.totalorder %s135, %s149
      %p151 = scmp.eq.s32.totalorder %s20, 0
      %p152 = por %p150, %p151
      %s154 = sadd.s32 %s153, 1
      %p157 = scmp.eq.s32.totalorder %s14, 1
      %p158 = scmp.ne.s32.totalorder %s153, %s155
      %p159 = scmp.eq.s32.totalorder %s14, 0
      %p160 = por %p158, %p159
      %p161 = scmp.ne.s32.totalorder %s153, %s155
      %p162 = scmp.eq.s32.totalorder %s19, 1
      %p163 = por %p161, %p162
      %p164 = scmp.ne.s32.totalorder %s155, %s156
      %p165 = scmp.eq.s32.totalorder %s19, 0
      %p166 = por %p164, %p165
      %p167 = scmp.ne.s32.totalorder %s155, %s156
      %p168 = scmp.eq.s32.totalorder %s20, 1
      %p169 = por %p167, %p168
      %p171 = scmp.ne.s32.totalorder %s156, %s170
      %p172 = scmp.eq.s32.totalorder %s20, 0
      %p173 = por %p171, %p172
      %s174 = ssub.s32 %s14, %s21
      %p175 = scmp.eq.s32.totalorder %s174, 0
      %s177 = sadd.s32 %s176, 1
      %s178 = scalar_select %p175, %s176, %s177
      %p181 = pneg %p175
      %p182 = scmp.eq.s32.totalorder %s14, 1
      %p183 = por %p181, %p182
      %p184 = scmp.ne.s32.totalorder %s176, %s179
      %p185 = scmp.eq.s32.totalorder %s14, 0
      %p186 = por %p184, %p185
      %p187 = scmp.ne.s32.totalorder %s176, %s179
      %p188 = scmp.eq.s32.totalorder %s19, 1
      %p189 = por %p187, %p188
      %p190 = scmp.ne.s32.totalorder %s179, %s180
      %p191 = scmp.eq.s32.totalorder %s19, 0
      %p192 = por %p190, %p191
      %p193 = scmp.ne.s32.totalorder %s179, %s180
      %p194 = scmp.eq.s32.totalorder %s20, 1
      %p195 = por %p193, %p194
      %p197 = scmp.ne.s32.totalorder %s180, %s196
      %p198 = scmp.eq.s32.totalorder %s20, 0
      %p199 = por %p197, %p198
      %p200 = scmp.le.s32.totalorder 1, %s14
      %p201 = scmp.lt.s32.totalorder %s14, 3
      %p202 = pnand %p200, %p201
      %p203 = pneg %p202
      // Predicated region
      $region9: #{naive_neural_forward.1} parent=5 // pred_check
        _
      $region10: #{naive_neural_forward.1} parent=5 // pred_check_branch
        %205 = sbr.rel (%p202) target = $region12
      $region11: #{naive_neural_forward.1} parent=5 // pred_region
        %s206 = ssub.s32 %s14, 1
        // Predicated region
        $region13: #{naive_neural_forward.1} parent=11 // pred_check
          %p207 = pneg %p61
        $region14: #{naive_neural_forward.1} parent=11 // pred_check_branch
          %209 = sbr.rel (%p207) target = $region16
        $region15: #{naive_neural_forward.1} parent=11 // pred_region
          _
        $region16: #{naive_neural_forward.1} parent=11 // pred_fallthru
          _
        // Predicated region
        $region17: #{naive_neural_forward.1} parent=11 // pred_check
          %p210 = pneg %p82
        $region18: #{naive_neural_forward.1} parent=11 // pred_check_branch
          %212 = sbr.rel (%p210) target = $region20
        $region19: #{naive_neural_forward.1} parent=11 // pred_region
          _
        $region20: #{naive_neural_forward.1} parent=11 // pred_fallthru
          _
        // Predicated region
        $region21: #{naive_neural_forward.1} parent=11 // pred_check
          %p213 = pneg %p103
        $region22: #{naive_neural_forward.1} parent=11 // pred_check_branch
          %215 = sbr.rel (%p213) target = $region24
        $region23: #{naive_neural_forward.1} parent=11 // pred_region
          _
        $region24: #{naive_neural_forward.1} parent=11 // pred_fallthru
          _
        // Predicated region
        $region25: #{naive_neural_forward.1} parent=11 // pred_check
          %p216 = pneg %p124
        $region26: #{naive_neural_forward.1} parent=11 // pred_check_branch
          %218 = sbr.rel (%p216) target = $region28
        $region27: #{naive_neural_forward.1} parent=11 // pred_region
          _
        $region28: #{naive_neural_forward.1} parent=11 // pred_fallthru
          _
        // Predicated region
        $region29: #{naive_neural_forward.1} parent=11 // pred_check
          %p219 = pneg %p145
        $region30: #{naive_neural_forward.1} parent=11 // pred_check_branch
          %221 = sbr.rel (%p219) target = $region32
        $region31: #{naive_neural_forward.1} parent=11 // pred_region
          _
        $region32: #{naive_neural_forward.1} parent=11 // pred_fallthru
          _
        // Predicated region
        $region33: #{naive_neural_forward.1} parent=11 // pred_check
          %p222 = pneg %p166
        $region34: #{naive_neural_forward.1} parent=11 // pred_check_branch
          %224 = sbr.rel (%p222) target = $region36
        $region35: #{naive_neural_forward.1} parent=11 // pred_region
          _
        $region36: #{naive_neural_forward.1} parent=11 // pred_fallthru
          _
      $region12: #{naive_neural_forward.1} parent=5 // pred_fallthru
        _
      %p225 = scmp.lt.s32.totalorder %s14, 2
      // Predicated region
      $region37: #{naive_neural_forward.1} parent=5 // pred_check
        %p226 = pneg %p225
      $region38: #{naive_neural_forward.1} parent=5 // pred_check_branch
        %228 = sbr.rel (%p226) target = $region40
      $region39: #{naive_neural_forward.1} parent=5 // pred_region
        // Predicated region
        $region41: #{naive_neural_forward.1} parent=39 // pred_check
          %p229 = pneg %p34
        $region42: #{naive_neural_forward.1} parent=39 // pred_check_branch
          %231 = sbr.rel (%p229) target = $region44
        $region43: #{naive_neural_forward.1} parent=39 // pred_region
          %s232 = sand.u32 %s24, 1
          %s233 = sand.u32 %s24, 1
          %s234 = smul.addr %s233, 16
          %s235 = scalar_lea.vmem [#allocation3], %s234
          %s236 = smul.u32 2, %s14
          %s237 = smul.addr %s236, 4
          %s238 = scalar_lea.vmem %s0, %s237
          // Predicated region
          $region45: #{naive_neural_forward.1} parent=43 // pred_check
            _
          $region46: #{naive_neural_forward.1} parent=43 // pred_check_branch
            %240 = sbr.rel (0) target = $region48
          $region47: #{naive_neural_forward.1} parent=43 // pred_region
            // Predicated region
            $region49: #{naive_neural_forward.1} parent=47 // pred_check
              _
            $region50: #{naive_neural_forward.1} parent=47 // pred_check_branch
              %242 = sbr.rel (0) target = $region52
            $region51: #{naive_neural_forward.1} parent=47 // pred_region
              // Predicated region
              $region64: #{naive_neural_forward.1} parent=51 // pred_check
                _
              $region65: #{naive_neural_forward.1} parent=51 // pred_check_branch
                %260 = sbr.rel (0) target = $region67
              $region66: #{naive_neural_forward.1} parent=51 // pred_region
                loop: start=0, step=1, limit=1
                $region68: #{naive_neural_forward.1} parent=66 // loop_pre_header
                  _
                $region69: #{naive_neural_forward.1} parent=66 // loop_header
                  %s262 = sphi 0, %s266
                  %p263 = scmp.ge.s32.totalorder %s262, 1
                  %s267 = sphi %s238, %s238
                  %s268 = sphi %s235, %s235
                $region70: #{naive_neural_forward.1} parent=66 // loop_header_branch
                  %265 = sbr.rel (%p263) target = $region74
                $region71: #{naive_neural_forward.1} parent=66 // loop_body
                  %v269 = vld [vmem:[%s267] sm:$0xff]
                  %270 = vst [vmem:[%s268] sm:$0xff] %v269
                  %v271 = vld [vmem:[%s267 + $0x10] sm:$0xff]
                  %272 = vst [vmem:[%s268 + $0x8] sm:$0xff] %v271
                $region72: #{naive_neural_forward.1} parent=66 // loop_footer
                  %s266 = sadd.s32 1, %s262
                $region73: #{naive_neural_forward.1} parent=66 // loop_footer_branch
                  %261 = sbr.rel target = $region69
                $region74: #{naive_neural_forward.1} parent=66 // loop_exit
                  _
              $region67: #{naive_neural_forward.1} parent=51 // pred_fallthru
                _
              // Predicated region
              $region75: #{naive_neural_forward.1} parent=51 // pred_check
                _
              $region76: #{naive_neural_forward.1} parent=51 // pred_check_branch
                %274 = sbr.rel target = $region78
              $region77: #{naive_neural_forward.1} parent=51 // pred_region
                _
              $region78: #{naive_neural_forward.1} parent=51 // pred_fallthru
                _
            $region52: #{naive_neural_forward.1} parent=47 // pred_fallthru
              _
            // Predicated region
            $region53: #{naive_neural_forward.1} parent=47 // pred_check
              _
            $region54: #{naive_neural_forward.1} parent=47 // pred_check_branch
              %244 = sbr.rel target = $region56
            $region55: #{naive_neural_forward.1} parent=47 // pred_region
              %s246 = ssub.s32 256, 1
              loop: start=0, step=1, limit=1
              $region57: #{naive_neural_forward.1} parent=55 // loop_pre_header
                _
              $region58: #{naive_neural_forward.1} parent=55 // loop_header
                %s248 = sphi 0, %s252
                %p249 = scmp.ge.s32.totalorder %s248, 1
                %s253 = sphi %s238, %s238
                %s254 = sphi %s235, %s235
              $region59: #{naive_neural_forward.1} parent=55 // loop_header_branch
                %251 = sbr.rel (%p249) target = $region63
              $region60: #{naive_neural_forward.1} parent=55 // loop_body
                %v255 = vld [vmem:[%s253] sm:%s246]
                %256 = vst [vmem:[%s254] sm:%s246] %v255
                %v257 = vld [vmem:[%s253 + $0x10] sm:%s246]
                %258 = vst [vmem:[%s254 + $0x8] sm:%s246] %v257
              $region61: #{naive_neural_forward.1} parent=55 // loop_footer
                %s252 = sadd.s32 1, %s248
              $region62: #{naive_neural_forward.1} parent=55 // loop_footer_branch
                %247 = sbr.rel target = $region58
              $region63: #{naive_neural_forward.1} parent=55 // loop_exit
                _
            $region56: #{naive_neural_forward.1} parent=47 // pred_fallthru
              _
          $region48: #{naive_neural_forward.1} parent=43 // pred_fallthru
            _
          %275 = vnop
        $region44: #{naive_neural_forward.1} parent=39 // pred_fallthru
          _
      $region40: #{naive_neural_forward.1} parent=5 // pred_fallthru
        _
      %p276 = scmp.le.s32.totalorder 1, %s14
      %p277 = scmp.lt.s32.totalorder %s14, 3
      %p278 = pnand %p276, %p277
      %p279 = pneg %p278
      // Predicated region
      $region79: #{naive_neural_forward.1} parent=5 // pred_check
        _
      $region80: #{naive_neural_forward.1} parent=5 // pred_check_branch
        %281 = sbr.rel (%p278) target = $region82
      $region81: #{naive_neural_forward.1} parent=5 // pred_region
        %s282 = ssub.s32 %s14, 1
        %s283 = sand.u32 %s27, 1
        %s284 = sand.u32 %s27, 1
        %s285 = smul.addr %s284, 16
        %s286 = scalar_lea.vmem [#allocation3], %s285
        // Predicated region
        $region83: #{naive_neural_forward.1} parent=81 // pred_check
          %p287 = pneg %p40
        $region84: #{naive_neural_forward.1} parent=81 // pred_check_branch
          %289 = sbr.rel (%p287) target = $region86
        $region85: #{naive_neural_forward.1} parent=81 // pred_region
          _
        $region86: #{naive_neural_forward.1} parent=81 // pred_fallthru
          _
        %s290 = sand.u32 %s27, 1
        %s291 = sand.u32 %s27, 1
        %s292 = smul.addr %s291, 16
        %s293 = scalar_lea.vmem [#allocation3], %s292
        %p294 = pneg %p40
        %p295 = pneg %p37
        %p296 = pneg %p61
        %p297 = pneg %p58
        %p298 = pneg %p82
        %p299 = pneg %p79
        %p300 = pneg %p103
        %p301 = pneg %p100
        %p302 = pneg %p124
        %p303 = pneg %p121
        %p304 = pneg %p145
        %p305 = pneg %p142
        %p306 = pneg %p166
        %p307 = pneg %p163
        %p308 = pneg %p192
        %p309 = pneg %p189
        %s310 = smul.u32 2, %s19
        %p311 = scmp.lt.s32.totalorder %s310, 3
        %s312 = scalar_select %p311, %s310, 3
        %s313 = scalar_lea.vmem %s7, %s312
        %s314 = smul.u32 2, %s19
        %s315 = smul.u32 2, %s19
        %p316 = scmp.lt.s32.totalorder %s315, 3
        %s317 = scalar_select %p316, %s315, 3
        %s318 = scalar_lea.vmem %s7, %s317
        %s319 = smul.u32 2, %s19
        %v321 = vld [vmem:[%s1] sm:$0xf]
        %v322 = vld [vmem:[%s1 + $0x4] sm:$0xf]
        %v323 = vld [vmem:[%s1 + $0x8] sm:$0xf]
        %v324 = vld [vmem:[%s1 + $0xc] sm:$0xf]
        %v325 = vld [vmem:[%s1 + $0x10] sm:$0xf]
        %v326 = vld [vmem:[%s1 + $0x14] sm:$0xf]
        %v327 = vld [vmem:[%s1 + $0x18] sm:$0xf]
        %v328 = vld [vmem:[%s1 + $0x1c] sm:$0xf]
        %v329 = vld [vmem:[%s1 + $0x20] sm:$0xf]
        %v330 = vld [vmem:[%s1 + $0x24] sm:$0xf]
        %v331 = vld [vmem:[%s1 + $0x28] sm:$0xf]
        %v332 = vld [vmem:[%s1 + $0x2c] sm:$0xf]
        %v333 = vld [vmem:[%s1 + $0x30] sm:$0xf]
        %v334 = vld [vmem:[%s1 + $0x34] sm:$0xf]
        %v335 = vld [vmem:[%s1 + $0x38] sm:$0xf]
        %v336 = vld [vmem:[%s1 + $0x3c] sm:$0xf]
        %v337 = vld [vmem:[%s286] sm:$0xff]
        %v338 = vld [vmem:[%s286 + $0x8] sm:$0xff]
        %v339 = vld [vmem:[%s2] sm:$0xff]
        %v340 = vld [vmem:[%s2 + $0x8] sm:$0xff]
        %v341 = vld [vmem:[%s2 + $0x10] sm:$0xff]
        %v342 = vld [vmem:[%s2 + $0x18] sm:$0xff]
        %v343 = vld [vmem:[%s2 + $0x20] sm:$0xff]
        %v344 = vld [vmem:[%s2 + $0x28] sm:$0xff]
        %v345 = vld [vmem:[%s2 + $0x30] sm:$0xff]
        %v346 = vld [vmem:[%s2 + $0x38] sm:$0xff]
        %v347 = vld [vmem:[%s2 + $0x40] sm:$0xff]
        %v348 = vld [vmem:[%s2 + $0x48] sm:$0xff]
        %v349 = vld [vmem:[%s2 + $0x50] sm:$0xff]
        %v350 = vld [vmem:[%s2 + $0x58] sm:$0xff]
        %v351 = vld [vmem:[%s2 + $0x60] sm:$0xff]
        %v352 = vld [vmem:[%s2 + $0x68] sm:$0xff]
        %v353 = vld [vmem:[%s2 + $0x70] sm:$0xff]
        %v354 = vld [vmem:[%s2 + $0x78] sm:$0xff]
        %356 = vset.pattern.permute.xlu0 0
        %357 = vperm.xlu0 %356, %v339
        %v358 = vpop.permute.xlu0 %357
        %361 = vset.pattern.permute.xlu0 0
        %362 = vperm.xlu0 %361, %v340
        %v363 = vpop.permute.xlu0 %362
        %366 = vset.pattern.permute.xlu0 0
        %367 = vperm.xlu0 %366, %v341
        %v368 = vpop.permute.xlu0 %367
        %371 = vset.pattern.permute.xlu0 0
        %372 = vperm.xlu0 %371, %v342
        %v373 = vpop.permute.xlu0 %372
        %376 = vset.pattern.permute.xlu0 0
        %377 = vperm.xlu0 %376, %v343
        %v378 = vpop.permute.xlu0 %377
        %381 = vset.pattern.permute.xlu0 0
        %382 = vperm.xlu0 %381, %v344
        %v383 = vpop.permute.xlu0 %382
        %386 = vset.pattern.permute.xlu0 0
        %387 = vperm.xlu0 %386, %v345
        %v388 = vpop.permute.xlu0 %387
        %391 = vset.pattern.permute.xlu0 0
        %392 = vperm.xlu0 %391, %v346
        %v393 = vpop.permute.xlu0 %392
        %396 = vset.pattern.permute.xlu0 0
        %397 = vperm.xlu0 %396, %v347
        %v398 = vpop.permute.xlu0 %397
        %401 = vset.pattern.permute.xlu0 0
        %402 = vperm.xlu0 %401, %v348
        %v403 = vpop.permute.xlu0 %402
        %406 = vset.pattern.permute.xlu0 0
        %407 = vperm.xlu0 %406, %v349
        %v408 = vpop.permute.xlu0 %407
        %411 = vset.pattern.permute.xlu0 0
        %412 = vperm.xlu0 %411, %v350
        %v413 = vpop.permute.xlu0 %412
        %416 = vset.pattern.permute.xlu0 0
        %417 = vperm.xlu0 %416, %v351
        %v418 = vpop.permute.xlu0 %417
        %421 = vset.pattern.permute.xlu0 0
        %422 = vperm.xlu0 %421, %v352
        %v423 = vpop.permute.xlu0 %422
        %426 = vset.pattern.permute.xlu0 0
        %427 = vperm.xlu0 %426, %v353
        %v428 = vpop.permute.xlu0 %427
        %431 = vset.pattern.permute.xlu0 0
        %432 = vperm.xlu0 %431, %v354
        %v433 = vpop.permute.xlu0 %432
        %v451 = vunpack.c.l.b16 %v321
        %v452 = vunpack.c.l.b16 %v322
        %v453 = vunpack.c.l.b16 %v323
        %v454 = vunpack.c.l.b16 %v324
        %v455 = vunpack.c.l.b16 %v325
        %v456 = vunpack.c.l.b16 %v326
        %v457 = vunpack.c.l.b16 %v327
        %v458 = vunpack.c.l.b16 %v328
        %v459 = vunpack.c.l.b16 %v329
        %v460 = vunpack.c.l.b16 %v330
        %v461 = vunpack.c.l.b16 %v331
        %v462 = vunpack.c.l.b16 %v332
        %v463 = vunpack.c.l.b16 %v333
        %v464 = vunpack.c.l.b16 %v334
        %v465 = vunpack.c.l.b16 %v335
        %v466 = vunpack.c.l.b16 %v336
        %v467 = vpack.c.b16 %v452, %v451
        %v468 = vpack.c.b16 %v454, %v453
        %v469 = vpack.c.b16 %v456, %v455
        %v470 = vpack.c.b16 %v458, %v457
        %v471 = vpack.c.b16 %v460, %v459
        %v472 = vpack.c.b16 %v462, %v461
        %v473 = vpack.c.b16 %v464, %v463
        %v474 = vpack.c.b16 %v466, %v465
        %v477 = vunpack.c.l.b16 %v337
        %v478 = vunpack.c.h.b16 %v337
        %v479 = vunpack.c.l.b16 %v338
        %v480 = vunpack.c.h.b16 %v338
        %v481 = vpack.c.b16 %v479, %v477
        %v482 = vpack.c.b16 %v480, %v478
        %vm485 = vcmask 130048
        %v487 = vsel %vm485, %v467, 0
        %v490 = vsel %vm485, %v468, 0
        %v493 = vsel %vm485, %v469, 0
        %v496 = vsel %vm485, %v470, 0
        %v499 = vsel %vm485, %v471, 0
        %v502 = vsel %vm485, %v472, 0
        %v505 = vsel %vm485, %v473, 0
        %v508 = vsel %vm485, %v474, 0
        %510 = vmatprep.subr.bf16.mxu0 0
        %511 = vmatpush1.bf16.msra.mxu0 0
        %512 = vmatprep.subr.bf16.mxu0 0
        %513 = vmatpush1.bf16.msra.mxu0 0
        %514 = vmatprep.subr.bf16.mxu0 0
        %515 = vmatpush1.bf16.msra.mxu0 0
        %516 = vmatprep.subr.bf16.mxu0 0
        %517 = vmatpush1.bf16.msra.mxu0 0
        %518 = vmatprep.subr.bf16.mxu0 0
        %519 = vmatpush1.bf16.msra.mxu0 0
        %520 = vmatprep.subr.bf16.mxu0 0
        %521 = vmatpush1.bf16.msra.mxu0 0
        %522 = vmatprep.subr.bf16.mxu0 0
        %523 = vmatpush1.bf16.msra.mxu0 0
        %524 = vmatprep.subr.bf16.mxu0 %v482
        %525 = vmatpush1.bf16.msra.mxu0 %v481
        %526 = vmatprep.subr.bf16.mxu0 0
        %527 = vmatpush2.bf16.msra.mxu0 0
        %528 = vmatprep.subr.bf16.mxu0 0
        %529 = vmatpush2.bf16.msra.mxu0 0
        %530 = vmatprep.subr.bf16.mxu0 0
        %531 = vmatpush2.bf16.msra.mxu0 0
        %532 = vmatprep.subr.bf16.mxu0 0
        %533 = vmatpush2.bf16.msra.mxu0 0
        %534 = vmatprep.subr.bf16.mxu0 0
        %535 = vmatpush2.bf16.msra.mxu0 0
        %536 = vmatprep.subr.bf16.mxu0 0
        %537 = vmatpush2.bf16.msra.mxu0 0
        %538 = vmatprep.subr.bf16.mxu0 0
        %539 = vmatpush2.bf16.msra.mxu0 0
        %540 = vmatprep.subr.bf16.mxu0 0
        %541 = vmatpush2.bf16.msra.mxu0 0
        %542 = vmatprep.mubr.bf16.mxu0 0
        %543 = vmatmul.mubr.bf16.gmra.mxu0 %v487
        %v544 = vpop.f32.mrf.mxu0
        %v545 = vadd.f32 %v358, %v544
        %v546 = vpop.f32.mrf.mxu0
        %v547 = vadd.f32 %v358, %v546
        %v548 = vpop.f32.mrf.mxu0
        %v549 = vadd.f32 %v363, %v548
        %v550 = vpop.f32.mrf.mxu0
        %v551 = vadd.f32 %v363, %v550
        %552 = vmatprep.mubr.bf16.mxu0 0
        %553 = vmatmul.mubr.bf16.gmra.mxu0 %v490
        %v554 = vpop.f32.mrf.mxu0
        %v555 = vadd.f32 %v368, %v554
        %v556 = vpop.f32.mrf.mxu0
        %v557 = vadd.f32 %v368, %v556
        %v558 = vpop.f32.mrf.mxu0
        %v559 = vadd.f32 %v373, %v558
        %v560 = vpop.f32.mrf.mxu0
        %v561 = vadd.f32 %v373, %v560
        %562 = vmatprep.mubr.bf16.mxu0 0
        %563 = vmatmul.mubr.bf16.gmra.mxu0 %v493
        %v564 = vpop.f32.mrf.mxu0
        %v565 = vadd.f32 %v378, %v564
        %v566 = vpop.f32.mrf.mxu0
        %v567 = vadd.f32 %v378, %v566
        %v568 = vpop.f32.mrf.mxu0
        %v569 = vadd.f32 %v383, %v568
        %v570 = vpop.f32.mrf.mxu0
        %v571 = vadd.f32 %v383, %v570
        %572 = vmatprep.mubr.bf16.mxu0 0
        %573 = vmatmul.mubr.bf16.gmra.mxu0 %v496
        %v574 = vpop.f32.mrf.mxu0
        %v575 = vadd.f32 %v388, %v574
        %v576 = vpop.f32.mrf.mxu0
        %v577 = vadd.f32 %v388, %v576
        %v578 = vpop.f32.mrf.mxu0
        %v579 = vadd.f32 %v393, %v578
        %v580 = vpop.f32.mrf.mxu0
        %v581 = vadd.f32 %v393, %v580
        %582 = vmatprep.mubr.bf16.mxu0 0
        %583 = vmatmul.mubr.bf16.gmra.mxu0 %v499
        %v584 = vpop.f32.mrf.mxu0
        %v585 = vadd.f32 %v398, %v584
        %v586 = vpop.f32.mrf.mxu0
        %v587 = vadd.f32 %v398, %v586
        %v588 = vpop.f32.mrf.mxu0
        %v589 = vadd.f32 %v403, %v588
        %v590 = vpop.f32.mrf.mxu0
        %v591 = vadd.f32 %v403, %v590
        %592 = vmatprep.mubr.bf16.mxu0 0
        %593 = vmatmul.mubr.bf16.gmra.mxu0 %v502
        %v594 = vpop.f32.mrf.mxu0
        %v595 = vadd.f32 %v408, %v594
        %v596 = vpop.f32.mrf.mxu0
        %v597 = vadd.f32 %v408, %v596
        %v598 = vpop.f32.mrf.mxu0
        %v599 = vadd.f32 %v413, %v598
        %v600 = vpop.f32.mrf.mxu0
        %v601 = vadd.f32 %v413, %v600
        %602 = vmatprep.mubr.bf16.mxu0 0
        %603 = vmatmul.mubr.bf16.gmra.mxu0 %v505
        %v604 = vpop.f32.mrf.mxu0
        %v605 = vadd.f32 %v418, %v604
        %v606 = vpop.f32.mrf.mxu0
        %v607 = vadd.f32 %v418, %v606
        %v608 = vpop.f32.mrf.mxu0
        %v609 = vadd.f32 %v423, %v608
        %v610 = vpop.f32.mrf.mxu0
        %v611 = vadd.f32 %v423, %v610
        %612 = vmatprep.mubr.bf16.mxu0 0
        %613 = vmatmul.mubr.bf16.gmra.mxu0 %v508
        %v614 = vpop.f32.mrf.mxu0
        %v615 = vadd.f32 %v428, %v614
        %v616 = vpop.f32.mrf.mxu0
        %v617 = vadd.f32 %v428, %v616
        %v618 = vpop.f32.mrf.mxu0
        %v619 = vadd.f32 %v433, %v618
        %v620 = vpop.f32.mrf.mxu0
        %v621 = vadd.f32 %v433, %v620
        %622 = vdwg.mxu0
        %v623 = vmax.f32 %v545, 0.0
        %v624 = vmax.f32 %v547, 0.0
        %v625 = vmax.f32 %v549, 0.0
        %v626 = vmax.f32 %v551, 0.0
        %v627 = vmax.f32 %v555, 0.0
        %v628 = vmax.f32 %v557, 0.0
        %v629 = vmax.f32 %v559, 0.0
        %v630 = vmax.f32 %v561, 0.0
        %v631 = vmax.f32 %v565, 0.0
        %v632 = vmax.f32 %v567, 0.0
        %v633 = vmax.f32 %v569, 0.0
        %v634 = vmax.f32 %v571, 0.0
        %v635 = vmax.f32 %v575, 0.0
        %v636 = vmax.f32 %v577, 0.0
        %v637 = vmax.f32 %v579, 0.0
        %v638 = vmax.f32 %v581, 0.0
        %v639 = vmax.f32 %v585, 0.0
        %v640 = vmax.f32 %v587, 0.0
        %v641 = vmax.f32 %v589, 0.0
        %v642 = vmax.f32 %v591, 0.0
        %v643 = vmax.f32 %v595, 0.0
        %v644 = vmax.f32 %v597, 0.0
        %v645 = vmax.f32 %v599, 0.0
        %v646 = vmax.f32 %v601, 0.0
        %v647 = vmax.f32 %v605, 0.0
        %v648 = vmax.f32 %v607, 0.0
        %v649 = vmax.f32 %v609, 0.0
        %v650 = vmax.f32 %v611, 0.0
        %v651 = vmax.f32 %v615, 0.0
        %v652 = vmax.f32 %v617, 0.0
        %v653 = vmax.f32 %v619, 0.0
        %v654 = vmax.f32 %v621, 0.0
        %v655 = vld [vmem:[%s3] sm:$0xf]
        %v656 = vld [vmem:[%s3 + $0x4] sm:$0xf]
        %v657 = vld [vmem:[%s3 + $0x8] sm:$0xf]
        %v658 = vld [vmem:[%s3 + $0xc] sm:$0xf]
        %v659 = vld [vmem:[%s3 + $0x10] sm:$0xf]
        %v660 = vld [vmem:[%s3 + $0x14] sm:$0xf]
        %v661 = vld [vmem:[%s3 + $0x18] sm:$0xf]
        %v662 = vld [vmem:[%s3 + $0x1c] sm:$0xf]
        %v663 = vpack.c.bf16 %v625, %v623
        %v664 = vpack.c.bf16 %v626, %v624
        %v665 = vpack.c.bf16 %v629, %v627
        %v666 = vpack.c.bf16 %v630, %v628
        %v667 = vpack.c.bf16 %v633, %v631
        %v668 = vpack.c.bf16 %v634, %v632
        %v669 = vpack.c.bf16 %v637, %v635
        %v670 = vpack.c.bf16 %v638, %v636
        %v671 = vpack.c.bf16 %v641, %v639
        %v672 = vpack.c.bf16 %v642, %v640
        %v673 = vpack.c.bf16 %v645, %v643
        %v674 = vpack.c.bf16 %v646, %v644
        %v675 = vpack.c.bf16 %v649, %v647
        %v676 = vpack.c.bf16 %v650, %v648
        %v677 = vpack.c.bf16 %v653, %v651
        %v678 = vpack.c.bf16 %v654, %v652
        %v679 = vld [vmem:[%s4] sm:$0xff]
        %v680 = vld [vmem:[%s4 + $0x8] sm:$0xff]
        %v681 = vld [vmem:[%s4 + $0x10] sm:$0xff]
        %v682 = vld [vmem:[%s4 + $0x18] sm:$0xff]
        %v683 = vld [vmem:[%s4 + $0x20] sm:$0xff]
        %v684 = vld [vmem:[%s4 + $0x28] sm:$0xff]
        %v685 = vld [vmem:[%s4 + $0x30] sm:$0xff]
        %v686 = vld [vmem:[%s4 + $0x38] sm:$0xff]
        %688 = vset.pattern.permute.xlu0 0
        %689 = vperm.xlu0 %688, %v679
        %v690 = vpop.permute.xlu0 %689
        %693 = vset.pattern.permute.xlu0 0
        %694 = vperm.xlu0 %693, %v680
        %v695 = vpop.permute.xlu0 %694
        %698 = vset.pattern.permute.xlu0 0
        %699 = vperm.xlu0 %698, %v681
        %v700 = vpop.permute.xlu0 %699
        %703 = vset.pattern.permute.xlu0 0
        %704 = vperm.xlu0 %703, %v682
        %v705 = vpop.permute.xlu0 %704
        %708 = vset.pattern.permute.xlu0 0
        %709 = vperm.xlu0 %708, %v683
        %v710 = vpop.permute.xlu0 %709
        %713 = vset.pattern.permute.xlu0 0
        %714 = vperm.xlu0 %713, %v684
        %v715 = vpop.permute.xlu0 %714
        %718 = vset.pattern.permute.xlu0 0
        %719 = vperm.xlu0 %718, %v685
        %v720 = vpop.permute.xlu0 %719
        %723 = vset.pattern.permute.xlu0 0
        %724 = vperm.xlu0 %723, %v686
        %v725 = vpop.permute.xlu0 %724
        %v735 = vunpack.c.l.b16 %v655
        %v736 = vunpack.c.l.b16 %v656
        %v737 = vunpack.c.l.b16 %v657
        %v738 = vunpack.c.l.b16 %v658
        %v739 = vunpack.c.l.b16 %v659
        %v740 = vunpack.c.l.b16 %v660
        %v741 = vunpack.c.l.b16 %v661
        %v742 = vunpack.c.l.b16 %v662
        %v743 = vpack.c.b16 %v736, %v735
        %v744 = vpack.c.b16 %v738, %v737
        %v745 = vpack.c.b16 %v740, %v739
        %v746 = vpack.c.b16 %v742, %v741
        %751 = vmatprep.subr.bf16.mxu0 %v678
        %752 = vmatpush1.bf16.msra.mxu0 %v677
        %753 = vmatprep.subr.bf16.mxu0 %v676
        %754 = vmatpush1.bf16.msra.mxu0 %v675
        %755 = vmatprep.subr.bf16.mxu0 %v674
        %756 = vmatpush1.bf16.msra.mxu0 %v673
        %757 = vmatprep.subr.bf16.mxu0 %v672
        %758 = vmatpush1.bf16.msra.mxu0 %v671
        %759 = vmatprep.subr.bf16.mxu0 %v670
        %760 = vmatpush1.bf16.msra.mxu0 %v669
        %761 = vmatprep.subr.bf16.mxu0 %v668
        %762 = vmatpush1.bf16.msra.mxu0 %v667
        %763 = vmatprep.subr.bf16.mxu0 %v666
        %764 = vmatpush1.bf16.msra.mxu0 %v665
        %765 = vmatprep.subr.bf16.mxu0 %v664
        %766 = vmatpush1.bf16.msra.mxu0 %v663
        %767 = vmatprep.subr.bf16.mxu0 0
        %768 = vmatpush2.bf16.msra.mxu0 0
        %769 = vmatprep.subr.bf16.mxu0 0
        %770 = vmatpush2.bf16.msra.mxu0 0
        %771 = vmatprep.subr.bf16.mxu0 0
        %772 = vmatpush2.bf16.msra.mxu0 0
        %773 = vmatprep.subr.bf16.mxu0 0
        %774 = vmatpush2.bf16.msra.mxu0 0
        %775 = vmatprep.subr.bf16.mxu0 0
        %776 = vmatpush2.bf16.msra.mxu0 0
        %777 = vmatprep.subr.bf16.mxu0 0
        %778 = vmatpush2.bf16.msra.mxu0 0
        %779 = vmatprep.subr.bf16.mxu0 0
        %780 = vmatpush2.bf16.msra.mxu0 0
        %781 = vmatprep.subr.bf16.mxu0 0
        %782 = vmatpush2.bf16.msra.mxu0 0
        %783 = vmatprep.mubr.bf16.mxu0 0
        %784 = vmatmul.mubr.bf16.gmra.mxu0 %v743
        %v785 = vpop.f32.mrf.mxu0
        %v786 = vadd.f32 %v690, %v785
        %v787 = vpop.f32.mrf.mxu0
        %v788 = vadd.f32 %v690, %v787
        %v789 = vpop.f32.mrf.mxu0
        %v790 = vadd.f32 %v695, %v789
        %v791 = vpop.f32.mrf.mxu0
        %v792 = vadd.f32 %v695, %v791
        %793 = vmatprep.mubr.bf16.mxu0 0
        %794 = vmatmul.mubr.bf16.gmra.mxu0 %v744
        %v795 = vpop.f32.mrf.mxu0
        %v796 = vadd.f32 %v700, %v795
        %v797 = vpop.f32.mrf.mxu0
        %v798 = vadd.f32 %v700, %v797
        %v799 = vpop.f32.mrf.mxu0
        %v800 = vadd.f32 %v705, %v799
        %v801 = vpop.f32.mrf.mxu0
        %v802 = vadd.f32 %v705, %v801
        %803 = vmatprep.mubr.bf16.mxu0 0
        %804 = vmatmul.mubr.bf16.gmra.mxu0 %v745
        %v805 = vpop.f32.mrf.mxu0
        %v806 = vadd.f32 %v710, %v805
        %v807 = vpop.f32.mrf.mxu0
        %v808 = vadd.f32 %v710, %v807
        %v809 = vpop.f32.mrf.mxu0
        %v810 = vadd.f32 %v715, %v809
        %v811 = vpop.f32.mrf.mxu0
        %v812 = vadd.f32 %v715, %v811
        %813 = vmatprep.mubr.bf16.mxu0 0
        %814 = vmatmul.mubr.bf16.gmra.mxu0 %v746
        %v815 = vpop.f32.mrf.mxu0
        %v816 = vadd.f32 %v720, %v815
        %v817 = vpop.f32.mrf.mxu0
        %v818 = vadd.f32 %v720, %v817
        %v819 = vpop.f32.mrf.mxu0
        %v820 = vadd.f32 %v725, %v819
        %v821 = vpop.f32.mrf.mxu0
        %v822 = vadd.f32 %v725, %v821
        %823 = vdwg.mxu0
        %v824 = vmax.f32 %v786, 0.0
        %v825 = vmax.f32 %v788, 0.0
        %v826 = vmax.f32 %v790, 0.0
        %v827 = vmax.f32 %v792, 0.0
        %v828 = vmax.f32 %v796, 0.0
        %v829 = vmax.f32 %v798, 0.0
        %v830 = vmax.f32 %v800, 0.0
        %v831 = vmax.f32 %v802, 0.0
        %v832 = vmax.f32 %v806, 0.0
        %v833 = vmax.f32 %v808, 0.0
        %v834 = vmax.f32 %v810, 0.0
        %v835 = vmax.f32 %v812, 0.0
        %v836 = vmax.f32 %v816, 0.0
        %v837 = vmax.f32 %v818, 0.0
        %v838 = vmax.f32 %v820, 0.0
        %v839 = vmax.f32 %v822, 0.0
        %v840 = vld [vmem:[%s5] sm:$0x1]
        %v841 = vpack.c.bf16 %v826, %v824
        %v842 = vpack.c.bf16 %v827, %v825
        %v843 = vpack.c.bf16 %v830, %v828
        %v844 = vpack.c.bf16 %v831, %v829
        %v845 = vpack.c.bf16 %v834, %v832
        %v846 = vpack.c.bf16 %v835, %v833
        %v847 = vpack.c.bf16 %v838, %v836
        %v848 = vpack.c.bf16 %v839, %v837
        %s849 = sld [smem:[#allocation2]]
        %v850 = vstv %s849
        %vm851 = vcmask 523264
        %v853 = vsel %vm851, %v840, 0
        %855 = vmatprep.subr.bf16.mxu0 0
        %856 = vmatpush1.bf16.msra.mxu0 0
        %857 = vmatprep.subr.bf16.mxu0 0
        %858 = vmatpush1.bf16.msra.mxu0 0
        %859 = vmatprep.subr.bf16.mxu0 0
        %860 = vmatpush1.bf16.msra.mxu0 0
        %861 = vmatprep.subr.bf16.mxu0 0
        %862 = vmatpush1.bf16.msra.mxu0 0
        %863 = vmatprep.subr.bf16.mxu0 %v848
        %864 = vmatpush1.bf16.msra.mxu0 %v847
        %865 = vmatprep.subr.bf16.mxu0 %v846
        %866 = vmatpush1.bf16.msra.mxu0 %v845
        %867 = vmatprep.subr.bf16.mxu0 %v844
        %868 = vmatpush1.bf16.msra.mxu0 %v843
        %869 = vmatprep.subr.bf16.mxu0 %v842
        %870 = vmatpush1.bf16.msra.mxu0 %v841
        %871 = vmatprep.subr.bf16.mxu0 0
        %872 = vmatpush2.bf16.msra.mxu0 0
        %873 = vmatprep.subr.bf16.mxu0 0
        %874 = vmatpush2.bf16.msra.mxu0 0
        %875 = vmatprep.subr.bf16.mxu0 0
        %876 = vmatpush2.bf16.msra.mxu0 0
        %877 = vmatprep.subr.bf16.mxu0 0
        %878 = vmatpush2.bf16.msra.mxu0 0
        %879 = vmatprep.subr.bf16.mxu0 0
        %880 = vmatpush2.bf16.msra.mxu0 0
        %881 = vmatprep.subr.bf16.mxu0 0
        %882 = vmatpush2.bf16.msra.mxu0 0
        %883 = vmatprep.subr.bf16.mxu0 0
        %884 = vmatpush2.bf16.msra.mxu0 0
        %885 = vmatprep.subr.bf16.mxu0 0
        %886 = vmatpush2.bf16.msra.mxu0 0
        %887 = vmatprep.mubr.bf16.mxu0 0
        %888 = vmatmul.mubr.bf16.gmra.mxu0 %v853
        %v889 = vpop.f32.mrf.mxu0
        %v890 = vadd.f32 %v850, %v889
        %v891 = vpop.f32.mrf.mxu0
        %v892 = vadd.f32 %v850, %v891
        %v893 = vpop.f32.mrf.mxu0
        %v894 = vpop.f32.mrf.mxu0
        %895 = vdwg.mxu0
        %v898 = vcombine.low %v890, %v892
        %v900 = vunpack.c.l.s4 1966171168
        %v901 = vunpack.c.0.s8 %v900
        %v902 = vlaneseq
        %v903 = vshrl.u32 %v902, 7
        %v904 = vsub.s32 %v901, %v903
        %v905 = vrot.slane %v898, %v904
        %v907 = vunpack.c.l.s4 1966171168
        %v908 = vunpack.c.0.s8 %v907
        %v909 = vlaneseq
        %v910 = vshrl.u32 %v909, 7
        %v911 = vsub.s32 %v908, %v910
        %v912 = vrot.slane %v905, %v911
        %v914 = vlaneseq
        %vm915 = vcmp.ge.s32.totalorder %v914, 0
        %vm916 = vcmp.lt.s32.totalorder %v914, 256
        %vm917 = vmand %vm915, %vm916
        %918 = vst.msk [vmem:[%s318] sm:$0x3] %vm917, %v912
        %s919 = smul.u32 2, %s19
        %p920 = scmp.lt.s32.totalorder %s919, 3
        %s921 = scalar_select %p920, %s919, 3
        %s922 = scalar_lea.vmem %s7, %s921
        // Predicated region
        $region87: #{naive_neural_forward.1} parent=81 // pred_check
          %p923 = pneg %p189
        $region88: #{naive_neural_forward.1} parent=81 // pred_check_branch
          %925 = sbr.rel (%p923) target = $region90
        $region89: #{naive_neural_forward.1} parent=81 // pred_region
          %s926 = smul.u32 2, %s19
        $region90: #{naive_neural_forward.1} parent=81 // pred_fallthru
          _
      $region82: #{naive_neural_forward.1} parent=5 // pred_fallthru
        _
      %p927 = scmp.le.s32.totalorder 2, %s14
      // Predicated region
      $region91: #{naive_neural_forward.1} parent=5 // pred_check
        %p928 = pneg %p927
      $region92: #{naive_neural_forward.1} parent=5 // pred_check_branch
        %930 = sbr.rel (%p928) target = $region94
      $region93: #{naive_neural_forward.1} parent=5 // pred_region
        %s931 = ssub.s32 %s14, 2
        // Predicated region
        $region95: #{naive_neural_forward.1} parent=93 // pred_check
          %p932 = pneg %p195
        $region96: #{naive_neural_forward.1} parent=93 // pred_check_branch
          %934 = sbr.rel (%p932) target = $region98
        $region97: #{naive_neural_forward.1} parent=93 // pred_region
          %s935 = smul.u32 2, %s20
          %p936 = scmp.lt.s32.totalorder %s935, 3
          %s937 = scalar_select %p936, %s935, 3
          %s938 = scalar_lea.vmem %s7, %s937
        $region98: #{naive_neural_forward.1} parent=93 // pred_fallthru
          _
      $region94: #{naive_neural_forward.1} parent=5 // pred_fallthru
        _
    $region6: #{naive_neural_forward.1} parent=1 // loop_footer
      %s18 = sadd.s32 1, %s14
    $region7: #{naive_neural_forward.1} parent=1 // loop_footer_branch
      %13 = sbr.rel target = $region3
    $region8: #{naive_neural_forward.1} parent=1 // loop_exit
      _

</llo_original>
